<compile_context>
chip_gen: v6e
topology: v6e:2x2x1
jax: 0.10.0
libtpu: 0.0.40
codegen_flags: <defaults>
</compile_context>

<pallas_src>
import math

import jax
import jax.numpy as jnp
from jax.experimental import pallas as pl
from jax.experimental.pallas import tpu as pltpu


def _out_size(n, k, stride, padding, dilation):
    return (n + 2 * padding - dilation * (k - 1) - 1) // stride + 1


def _round_up(n, m):
    return ((n + m - 1) // m) * m


def im2col(x, k, stride, padding, dilation):
    """x: (B, C, H, W) -> patches (B, C*k*k, L), row index c*k*k + kh*k + kw,
    L = Hout*Wout on the last (lane) axis.  Matches torch.nn.Unfold layout."""
    B, C, H, W = x.shape
    Hout = _out_size(H, k, stride, padding, dilation)
    Wout = _out_size(W, k, stride, padding, dilation)
    xp = jnp.pad(x, ((0, 0), (0, 0), (padding, padding), (padding, padding)))
    taps = []
    for i in range(k):
        for j in range(k):
            h0 = i * dilation
            w0 = j * dilation
            taps.append(xp[:, :, h0:h0 + stride * Hout:stride,
                           w0:w0 + stride * Wout:stride])  # (B, C, Hout, Wout)
    p = jnp.stack(taps, axis=2)                    # (B, C, k*k, Hout, Wout)
    p = p.reshape(B, C * k * k, Hout * Wout)       # (B, C*k*k, L)
    return p, Hout, Wout


def _pick_tiling(ckk, cskk, kk, opad, l_tile_cap):
    """Generation-aware lane-tile size and VMEM limit."""
    try:
        vmem_cap = int(pltpu.get_tpu_info().vmem_capacity_bytes)
    except Exception:
        vmem_cap = 64 * 1024 * 1024            # conservative (v7x per-TC)
    if vmem_cap >= 100 * 1024 * 1024:          # v5e / v6e: 128 MiB physical
        budget = 64 * 1024 * 1024
        tl = 2048
    else:                                      # v7x: 64 MiB per TensorCore
        budget = 40 * 1024 * 1024
        tl = 1024
    if l_tile_cap is not None:
        tl = min(tl, max(128, _round_up(l_tile_cap, 128)))
    # Per-lane-column bytes in flight per grid step:
    #   2x double-buffered streaming tiles (bf16 patches + bf16 scales
    #   + f32 s0 + f32 out) + bf16 mod scratch + f32 gate/chunk temps + f32 acc
    per_col = (2 * (ckk * 2 + cskk * 2 + 4 + opad * 4)
               + ckk * 2 + 3 * kk * 4 + opad * 4)
    resident = 2 * (opad * ckk * 2 + opad * 4)   # weight + bias buffers
    while tl > 128 and resident + per_col * tl > budget:
        tl -= 128
    return max(tl, 128), budget


def ada_conv2d_pallas(x, scales, weight, bias, k, stride=1, padding=0,
                      dilation=1, l_tile=None):
    """Adaptive conv2d.  x: (B, C, H, W) NCHW, scales: (B, Cs, H, W),
    weight: (O, C, k, k), bias: (O,).  Returns (B, O, Hout, Wout) NCHW."""
    B, C, H, W = x.shape
    Cs = scales.shape[1]
    O = weight.shape[0]
    kk = k * k
    center = (k // 2) * k + (k // 2)

    inp_unf, Hout, Wout = im2col(x, k, stride, padding, dilation)   # (B, C*kk, L)
    sc_unf, _, _ = im2col(scales, k, stride, padding, dilation)     # (B, Cs*kk, L)
    L = Hout * Wout

    # per-position mean over the Cs scale channels of the CENTER tap -> (B,1,L)
    s0 = jnp.mean(sc_unf[:, center::kk, :], axis=1,
                  keepdims=True).astype(jnp.float32)

    Opad = _round_up(O, 8)   # unmasked output stores / clean MXU pops

    tl, vmem_limit = _pick_tiling(C * kk, Cs * kk, kk, Opad, l_tile)
    tl = min(tl, _round_up(L, 128))
    Lpad = _round_up(L, tl)

    if Lpad != L:
        pad = Lpad - L
        inp_unf = jnp.pad(inp_unf, ((0, 0), (0, 0), (0, pad)))
        sc_unf = jnp.pad(sc_unf, ((0, 0), (0, 0), (0, pad)))
        s0 = jnp.pad(s0, ((0, 0), (0, 0), (0, pad)))

    # bf16 DMA: halves HBM read bytes on a memory-bound kernel; the MXU
    # operands were bf16 anyway (f32 accumulation inside the kernel).
    inp_unf = inp_unf.astype(jnp.bfloat16)
    sc_unf = sc_unf.astype(jnp.bfloat16)

    # weight (O, C, k, k) -> (Opad, C*kk) bf16 (same row ordering as patches);
    # bias -> (Opad, 1) f32 so it broadcasts over the lane-dense output.
    w2 = weight.reshape(O, C * kk).astype(jnp.bfloat16)
    b2 = bias.reshape(O, 1).astype(jnp.float32)
    if Opad != O:
        w2 = jnp.pad(w2, ((0, Opad - O), (0, 0)))
        b2 = jnp.pad(b2, ((0, Opad - O), (0, 0)))

    def kernel(inp_ref, sc_ref, s0_ref, w_ref, b_ref, out_ref, mod_ref):
        # inp_ref: (1, C*kk, tl) bf16   sc_ref: (1, Cs*kk, tl) bf16
        # s0_ref : (1, 1, tl)    f32    w_ref : (Opad, C*kk)   bf16
        # b_ref  : (Opad, 1)     f32    out_ref: (1, Opad, tl) f32
        # mod_ref: (C*kk, tl) bf16 VMEM scratch
        s0 = s0_ref[0]                                        # (1, tl) f32
        sc = sc_ref[0]                                        # (Cs*kk, tl) bf16
        inp = inp_ref[0]                                      # (C*kk, tl) bf16

        # per-tap gaussian response, averaged over the Cs scale channels
        g = None
        for cs in range(Cs):
            d = sc[cs * kk:(cs + 1) * kk, :].astype(jnp.float32) - s0
            e = jnp.exp(-0.5 * d * d)
            g = e if g is None else g + e
        g = g * (1.0 / Cs)                                    # (kk, tl) f32

        # modulate each channel's kk tap rows by the gate directly into a
        # bf16 scratch slab (no f32 g_full concat / no f32 full-slab temps)
        for c in range(C):
            mod_ref[c * kk:(c + 1) * kk, :] = (
                inp[c * kk:(c + 1) * kk, :] * g).astype(jnp.bfloat16)

        # one fused MXU matmul: (Opad, C*kk) @ (C*kk, tl) -> (Opad, tl) f32
        acc = jnp.dot(w_ref[...], mod_ref[...],
                      preferred_element_type=jnp.float32)
        out_ref[0] = (acc + b_ref[...]).astype(out_ref.dtype)

    # L-tiles lead the grid so both v7x TensorCores stay busy for small B.
    grid = (Lpad // tl, B)
    out = pl.pallas_call(
        kernel,
        out_shape=jax.ShapeDtypeStruct((B, Opad, Lpad), jnp.float32),
        grid_spec=pltpu.PrefetchScalarGridSpec(
            num_scalar_prefetch=0,
            grid=grid,
            in_specs=[
                pl.BlockSpec((1, C * kk, tl), lambda l, b: (b, 0, l)),
                pl.BlockSpec((1, Cs * kk, tl), lambda l, b: (b, 0, l)),
                pl.BlockSpec((1, 1, tl), lambda l, b: (b, 0, l)),
                # constant block index -> stays resident in VMEM across steps
                pl.BlockSpec((Opad, C * kk), lambda l, b: (0, 0)),
                pl.BlockSpec((Opad, 1), lambda l, b: (0, 0)),
            ],
            out_specs=pl.BlockSpec((1, Opad, tl), lambda l, b: (b, 0, l)),
            scratch_shapes=[pltpu.VMEM((C * kk, tl), jnp.bfloat16)],
        ),
        compiler_params=pltpu.CompilerParams(
            dimension_semantics=("parallel", "parallel"),
            vmem_limit_bytes=vmem_limit,
        ),
    )(inp_unf, sc_unf, s0, w2, b2)

    # drop O / lane padding -> NCHW (no transpose needed)
    return out[:, :O, :L].reshape(B, O, Hout, Wout)


def ada_conv2d_ref(x, scales, weight, bias, k, stride=1, padding=0, dilation=1):
    """Pure-JAX f32 reference mirroring the PyTorch manual_conv."""
    B, C, H, W = x.shape
    Cs = scales.shape[1]
    O = weight.shape[0]
    kk = k * k
    inp_u, Hout, Wout = im2col(x, k, stride, padding, dilation)     # (B, C*kk, L)
    sc_u, _, _ = im2col(scales, k, stride, padding, dilation)       # (B, Cs*kk, L)
    L = Hout * Wout
    inp_u = inp_u.reshape(B, C, kk, L)
    sc_u = sc_u.reshape(B, Cs, kk, L)
    center = (k // 2) * k + (k // 2)
    s0 = jnp.mean(sc_u[:, :, center:center + 1, :], axis=1, keepdims=True)
    g = jnp.mean(jnp.exp(-0.5 * jnp.square(sc_u - s0)), axis=1, keepdims=True)
    mod = inp_u * g
    out = jnp.einsum('bckl,ock->bol', mod, weight.reshape(O, C, kk))
    out = out + bias[None, :, None]
    return out.reshape(B, O, Hout, Wout)


if __name__ == "__main__":
    # module hyper-params (mirror adaConv2d.__init__)
    in_channels, out_channels, kernel_size = 4, 8, 3
    stride, padding, dilation = 1, 1, 1
    B, H, W = 2, 16, 16
    Cs = 2  # scales feature-map channels (independent of in_channels)

    key = jax.random.PRNGKey(0)
    kx, ks, kw = jax.random.split(key, 3)

    x = jax.random.normal(kx, (B, in_channels, H, W), dtype=jnp.float32)
    scales = jax.random.normal(ks, (B, Cs, H, W), dtype=jnp.float32)

    # deterministic xavier_uniform init for weight, zeros for bias (reset_parameters)
    fan_in = in_channels * kernel_size * kernel_size
    fan_out = out_channels * kernel_size * kernel_size
    bound = math.sqrt(6.0 / (fan_in + fan_out))
    weight = jax.random.uniform(
        kw, (out_channels, in_channels, kernel_size, kernel_size),
        minval=-bound, maxval=bound, dtype=jnp.float32)
    bias = jnp.zeros((out_channels,), dtype=jnp.float32)

    # small l_tile so the toy shapes exercise the (L/TL, B) grid (2x2 here)
    out = ada_conv2d_pallas(x, scales, weight, bias, kernel_size,
                            stride=stride, padding=padding, dilation=dilation,
                            l_tile=128)
    out = jax.block_until_ready(out)

    ref = jax.block_until_ready(
        ada_conv2d_ref(x, scales, weight, bias, kernel_size,
                       stride=stride, padding=padding, dilation=dilation))

    assert out.shape == (B, out_channels, H, W), out.shape
    # bf16-DMA'd patches/scales + bf16 MXU operands with f32 accumulation,
    # compared against the pure-f32 reference.
    assert jnp.allclose(out, ref, atol=3e-2, rtol=3e-2), \
        f"max abs err {jnp.max(jnp.abs(out - ref))}"
    print("KERNEL_OK")
</pallas_src>

<mosaic_0001>
module attributes {stable_mosaic.version = 11 : i64} {
  func.func @kernel(%arg0: i32, %arg1: i32, %arg2: memref<1x36x128xbf16, #tpu.memory_space<vmem>>, %arg3: memref<1x18x128xbf16, #tpu.memory_space<vmem>>, %arg4: memref<1x1x128xf32, #tpu.memory_space<vmem>>, %arg5: memref<8x36xbf16, #tpu.memory_space<vmem>>, %arg6: memref<8x1xf32, #tpu.memory_space<vmem>>, %arg7: memref<1x8x128xf32, #tpu.memory_space<vmem>>, %arg8: memref<36x128xbf16, #tpu.memory_space<vmem>>) attributes {dimension_semantics = [#tpu.dimension_semantics<parallel>, #tpu.dimension_semantics<parallel>], iteration_bounds = array<i64: 2, 2>, scalar_prefetch = 0 : i64, scratch_operands = 1 : i64, tpu.core_type = #tpu.core_type<tc>, window_params = [{transform_indices = @transform_0, window_bounds = array<i64: 1, 36, 128>}, {transform_indices = @transform_1, window_bounds = array<i64: 1, 18, 128>}, {transform_indices = @transform_2, window_bounds = array<i64: 1, 1, 128>}, {pipeline_mode = #tpu.pipeline_mode<synchronous>, transform_indices = @transform_3, window_bounds = array<i64: 8, 36>}, {pipeline_mode = #tpu.pipeline_mode<synchronous>, transform_indices = @transform_4, window_bounds = array<i64: 8, 1>}, {transform_indices = @transform_5, window_bounds = array<i64: 1, 8, 128>}]} {
    %c0 = arith.constant 0 : index
    %c0_0 = arith.constant 0 : index
    %c0_1 = arith.constant 0 : index
    %0 = vector.load %arg4[%c0, %c0_0, %c0_1] : memref<1x1x128xf32, #tpu.memory_space<vmem>>, vector<1x1x128xf32>
    %1 = vector.shape_cast %0 : vector<1x1x128xf32> to vector<1x128xf32>
    %c0_2 = arith.constant 0 : index
    %c0_3 = arith.constant 0 : index
    %c0_4 = arith.constant 0 : index
    %2 = vector.load %arg3[%c0_2, %c0_3, %c0_4] : memref<1x18x128xbf16, #tpu.memory_space<vmem>>, vector<1x18x128xbf16>
    %3 = vector.shape_cast %2 : vector<1x18x128xbf16> to vector<18x128xbf16>
    %c0_5 = arith.constant 0 : index
    %c0_6 = arith.constant 0 : index
    %c0_7 = arith.constant 0 : index
    %4 = vector.load %arg2[%c0_5, %c0_6, %c0_7] : memref<1x36x128xbf16, #tpu.memory_space<vmem>>, vector<1x36x128xbf16>
    %5 = vector.shape_cast %4 : vector<1x36x128xbf16> to vector<36x128xbf16>
    %6 = vector.extract_strided_slice %3 {offsets = [0, 0], sizes = [9, 128], strides = [1, 1]} : vector<18x128xbf16> to vector<9x128xbf16>
    %7 = arith.extf %6 : vector<9x128xbf16> to vector<9x128xf32>
    %8 = vector.broadcast %1 : vector<1x128xf32> to vector<9x128xf32>
    %9 = arith.subf %7, %8 : vector<9x128xf32>
    %cst = arith.constant -5.000000e-01 : f32
    %10 = vector.broadcast %cst : f32 to vector<9x128xf32>
    %11 = arith.mulf %10, %9 : vector<9x128xf32>
    %12 = arith.mulf %11, %9 : vector<9x128xf32>
    %13 = math.exp %12 : vector<9x128xf32>
    %14 = vector.extract_strided_slice %3 {offsets = [9, 0], sizes = [9, 128], strides = [1, 1]} : vector<18x128xbf16> to vector<9x128xbf16>
    %15 = arith.extf %14 : vector<9x128xbf16> to vector<9x128xf32>
    %16 = vector.broadcast %1 : vector<1x128xf32> to vector<9x128xf32>
    %17 = arith.subf %15, %16 : vector<9x128xf32>
    %cst_8 = arith.constant -5.000000e-01 : f32
    %18 = vector.broadcast %cst_8 : f32 to vector<9x128xf32>
    %19 = arith.mulf %18, %17 : vector<9x128xf32>
    %20 = arith.mulf %19, %17 : vector<9x128xf32>
    %21 = math.exp %20 : vector<9x128xf32>
    %22 = arith.addf %13, %21 : vector<9x128xf32>
    %cst_9 = arith.constant 5.000000e-01 : f32
    %23 = vector.broadcast %cst_9 : f32 to vector<9x128xf32>
    %24 = arith.mulf %22, %23 : vector<9x128xf32>
    %25 = vector.extract_strided_slice %5 {offsets = [0, 0], sizes = [9, 128], strides = [1, 1]} : vector<36x128xbf16> to vector<9x128xbf16>
    %26 = arith.extf %25 : vector<9x128xbf16> to vector<9x128xf32>
    %27 = arith.mulf %26, %24 : vector<9x128xf32>
    %28 = arith.truncf %27 : vector<9x128xf32> to vector<9x128xbf16>
    %c0_10 = arith.constant 0 : index
    %c0_11 = arith.constant 0 : index
    %29 = vector.load %arg8[%c0_10, %c0_11] : memref<36x128xbf16, #tpu.memory_space<vmem>>, vector<9x128xbf16>
    tpu.vector_store %arg8[%c0_10, %c0_11], %28 {strides = array<i32>} : memref<36x128xbf16, #tpu.memory_space<vmem>>, vector<9x128xbf16>,
    %30 = vector.extract_strided_slice %5 {offsets = [9, 0], sizes = [9, 128], strides = [1, 1]} : vector<36x128xbf16> to vector<9x128xbf16>
    %31 = arith.extf %30 : vector<9x128xbf16> to vector<9x128xf32>
    %32 = arith.mulf %31, %24 : vector<9x128xf32>
    %33 = arith.truncf %32 : vector<9x128xf32> to vector<9x128xbf16>
    %c9 = arith.constant 9 : index
    %c0_12 = arith.constant 0 : index
    %34 = vector.load %arg8[%c9, %c0_12] : memref<36x128xbf16, #tpu.memory_space<vmem>>, vector<9x128xbf16>
    tpu.vector_store %arg8[%c9, %c0_12], %33 {strides = array<i32>} : memref<36x128xbf16, #tpu.memory_space<vmem>>, vector<9x128xbf16>,
    %35 = vector.extract_strided_slice %5 {offsets = [18, 0], sizes = [9, 128], strides = [1, 1]} : vector<36x128xbf16> to vector<9x128xbf16>
    %36 = arith.extf %35 : vector<9x128xbf16> to vector<9x128xf32>
    %37 = arith.mulf %36, %24 : vector<9x128xf32>
    %38 = arith.truncf %37 : vector<9x128xf32> to vector<9x128xbf16>
    %c18 = arith.constant 18 : index
    %c0_13 = arith.constant 0 : index
    %39 = vector.load %arg8[%c18, %c0_13] : memref<36x128xbf16, #tpu.memory_space<vmem>>, vector<9x128xbf16>
    tpu.vector_store %arg8[%c18, %c0_13], %38 {strides = array<i32>} : memref<36x128xbf16, #tpu.memory_space<vmem>>, vector<9x128xbf16>,
    %40 = vector.extract_strided_slice %5 {offsets = [27, 0], sizes = [9, 128], strides = [1, 1]} : vector<36x128xbf16> to vector<9x128xbf16>
    %41 = arith.extf %40 : vector<9x128xbf16> to vector<9x128xf32>
    %42 = arith.mulf %41, %24 : vector<9x128xf32>
    %43 = arith.truncf %42 : vector<9x128xf32> to vector<9x128xbf16>
    %c27 = arith.constant 27 : index
    %c0_14 = arith.constant 0 : index
    %44 = vector.load %arg8[%c27, %c0_14] : memref<36x128xbf16, #tpu.memory_space<vmem>>, vector<9x128xbf16>
    tpu.vector_store %arg8[%c27, %c0_14], %43 {strides = array<i32>} : memref<36x128xbf16, #tpu.memory_space<vmem>>, vector<9x128xbf16>,
    %c0_15 = arith.constant 0 : index
    %c0_16 = arith.constant 0 : index
    %45 = vector.load %arg5[%c0_15, %c0_16] : memref<8x36xbf16, #tpu.memory_space<vmem>>, vector<8x36xbf16>
    %c0_17 = arith.constant 0 : index
    %c0_18 = arith.constant 0 : index
    %46 = vector.load %arg8[%c0_17, %c0_18] : memref<36x128xbf16, #tpu.memory_space<vmem>>, vector<36x128xbf16>
    %cst_19 = arith.constant dense<0.000000e+00> : vector<8x128xf32>
    %47 = tpu.matmul %45, %46, %cst_19 {dimension_numbers = #tpu.dot_dimension_numbers<[1], [0], [0], [1], [0, 0, 1, 1], [], []>} : vector<8x36xbf16>, vector<36x128xbf16>, vector<8x128xf32> -> vector<8x128xf32>
    %c0_20 = arith.constant 0 : index
    %c0_21 = arith.constant 0 : index
    %48 = vector.load %arg6[%c0_20, %c0_21] : memref<8x1xf32, #tpu.memory_space<vmem>>, vector<8x1xf32>
    %49 = vector.broadcast %48 : vector<8x1xf32> to vector<8x128xf32>
    %50 = arith.addf %47, %49 : vector<8x128xf32>
    %c0_22 = arith.constant 0 : index
    %c0_23 = arith.constant 0 : index
    %c0_24 = arith.constant 0 : index
    %51 = vector.load %arg7[%c0_22, %c0_23, %c0_24] : memref<1x8x128xf32, #tpu.memory_space<vmem>>, vector<1x8x128xf32>
    %52 = vector.shape_cast %51 : vector<1x8x128xf32> to vector<8x128xf32>
    %53 = vector.shape_cast %50 : vector<8x128xf32> to vector<1x8x128xf32>
    tpu.vector_store %arg7[%c0_22, %c0_23, %c0_24], %53 {strides = array<i32>} : memref<1x8x128xf32, #tpu.memory_space<vmem>>, vector<1x8x128xf32>,
    return
  }
  func.func @transform_0(%arg0: i32, %arg1: i32) -> (i32, i32, i32) {
    %c0_i32 = arith.constant 0 : i32
    %c0_i32_0 = arith.constant 0 : i32
    return %arg1, %c0_i32, %arg0 : i32, i32, i32
  }
  func.func @transform_1(%arg0: i32, %arg1: i32) -> (i32, i32, i32) {
    %c0_i32 = arith.constant 0 : i32
    %c0_i32_0 = arith.constant 0 : i32
    return %arg1, %c0_i32, %arg0 : i32, i32, i32
  }
  func.func @transform_2(%arg0: i32, %arg1: i32) -> (i32, i32, i32) {
    %c0_i32 = arith.constant 0 : i32
    %c0_i32_0 = arith.constant 0 : i32
    return %arg1, %c0_i32, %arg0 : i32, i32, i32
  }
  func.func @transform_3(%arg0: i32, %arg1: i32) -> (i32, i32) {
    %c0_i32 = arith.constant 0 : i32
    %c0_i32_0 = arith.constant 0 : i32
    %c0_i32_1 = arith.constant 0 : i32
    return %c0_i32, %c0_i32_0 : i32, i32
  }
  func.func @transform_4(%arg0: i32, %arg1: i32) -> (i32, i32) {
    %c0_i32 = arith.constant 0 : i32
    %c0_i32_0 = arith.constant 0 : i32
    %c0_i32_1 = arith.constant 0 : i32
    return %c0_i32, %c0_i32_0 : i32, i32
  }
  func.func @transform_5(%arg0: i32, %arg1: i32) -> (i32, i32, i32) {
    %c0_i32 = arith.constant 0 : i32
    %c0_i32_0 = arith.constant 0 : i32
    return %arg1, %c0_i32, %arg0 : i32, i32, i32
  }
}

</mosaic_0001>

<llo_original>
// kernel: tpu_custom_call.1
$region0: #{tpu_custom_call.1}
  #allocation0 [shape = 'u32[]', space=smem, size = 0x4, offset = 0x4, fixed_abs, tag = 'smem constant byte address 0x4 - core index']
  #allocation1 [shape = 'u32[144,128]{1,0:T(1,128)}', space=vmem, size = 0x12000, scoped, tag = 'internal scratch']
  #allocation2 [shape = 'bf16[36,128]{1,0:T(8,128)(2,1)}', space=vmem, size = 0x2800, scoped, tag = 'scratch operand']
  %s0 = inlined_call_operand.vmem [shape: bf16[2,36,256], index: 0, kind: input, shape index: {}]
  %s1 = inlined_call_operand.vmem [shape: bf16[2,18,256], index: 1, kind: input, shape index: {}]
  %s2 = inlined_call_operand.vmem [shape: f32[2,1,256], index: 2, kind: input, shape index: {}]
  %s3 = inlined_call_operand.vmem [shape: bf16[8,36], index: 3, kind: input, shape index: {}]
  %s4 = inlined_call_operand.vmem [shape: f32[8,1], index: 4, kind: input, shape index: {}]
  %s5 = inlined_call_operand.hbm [shape: f32[2,8,256], index: 5, kind: output, shape index: {}]
  %s6 = sld [smem:[#allocation0]]
  $region135: #{tpu_custom_call.1} parent=0
    _
  %s8 = ssub.s32 1, %s6
  %s9 = scalar_select 0, %s8, %s6
  $region1: #{tpu_custom_call.1} parent=0
    #allocation3 [shape = 'u8[20480]{0}', space=vmem, size = 0x5000, scoped, tag = 'input window, operand 0']
    #allocation4 [shape = 'u8[12288]{0}', space=vmem, size = 0x3000, scoped, tag = 'input window, operand 1']
    #allocation5 [shape = 'u8[8192]{0}', space=vmem, size = 0x2000, scoped, tag = 'output window, operand 0']
    #allocation6 [shape = 's32[2]{0}', space=sflag, size = 0x8, scoped, tag = 'scoped memory for tpu_custom_call.1']
    %10 = vsyncpa [#allocation6], 0
    %s11 = scalar_lea.sflag [#allocation6], 1
    %12 = vsyncpa %s11, 0
    loop: start=0, step=1, limit=6
    $region2: #{tpu_custom_call.1} parent=1 // loop_pre_header
      _
    $region3: #{tpu_custom_call.1} parent=1 // loop_header
      %s14 = sphi 0, %s18
      %p15 = scmp.ge.s32.totalorder %s14, 6
      %s21 = sphi 0, %s33
      %s22 = sphi 0, %s29
      %s23 = sphi 0, %s21
      %s24 = sphi 0, %s22
      %s25 = sphi 0, %s23
      %s26 = sphi 0, %s24
      %s38 = sphi 0, %s40
      %s41 = sphi 0, %s38
      %s42 = sphi 0, %s41
      %s58 = sphi 0, %s42
      %s66 = sphi 0, %s68
      %s69 = sphi 0, %s66
      %s70 = sphi 0, %s69
      %s86 = sphi 0, %s70
      %s94 = sphi 0, %s96
      %s97 = sphi 0, %s94
      %s98 = sphi 0, %s97
      %s114 = sphi 0, %s98
      %s118 = sphi 0, %s118
      %s120 = sphi 0, %s118
      %s121 = sphi 0, %s120
      %s135 = sphi 0, %s121
      %s139 = sphi 0, %s139
      %s141 = sphi 0, %s139
      %s142 = sphi 0, %s141
      %s156 = sphi 0, %s142
      %s164 = sphi 0, %s166
      %s167 = sphi 0, %s164
      %s168 = sphi 0, %s167
      %s184 = sphi 0, %s168
    $region4: #{tpu_custom_call.1} parent=1 // loop_header_branch
      %17 = sbr.rel (%p15) target = $region8
    $region5: #{tpu_custom_call.1} parent=1 // loop_body
      %s19 = ssub.s32 %s14, 1
      %s20 = ssub.s32 %s14, 2
      %s27 = sadd.s32 1, %s22
      %p28 = scmp.ge.s32.totalorder %s27, 2
      %s29 = scalar_select %p28, 0, %s27
      %s30 = sadd.s32 1, %s21
      %s31 = scalar_select %p28, %s30, %s21
      %p32 = scmp.ge.s32.totalorder %s31, 2
      %s33 = scalar_select %p32, 0, %s31
      %s34 = ssub.s32 %s22, %s29
      %s35 = ssub.s32 %s21, %s33
      %s36 = sor.u32 %s34, %s35
      %p37 = scmp.eq.s32.totalorder %s36, 0
      %s39 = sadd.s32 %s38, 1
      %s40 = scalar_select %p37, %s38, %s39
      %p43 = pneg %p37
      %p44 = scmp.eq.s32.totalorder %s14, 3
      %p45 = por %p43, %p44
      %p46 = scmp.ne.s32.totalorder %s38, %s41
      %p47 = scmp.eq.s32.totalorder %s14, 0
      %p48 = por %p46, %p47
      %p49 = scmp.ne.s32.totalorder %s38, %s41
      %p50 = scmp.eq.s32.totalorder %s19, 3
      %p51 = por %p49, %p50
      %p52 = scmp.ne.s32.totalorder %s41, %s42
      %p53 = scmp.eq.s32.totalorder %s19, 0
      %p54 = por %p52, %p53
      %p55 = scmp.ne.s32.totalorder %s41, %s42
      %p56 = scmp.eq.s32.totalorder %s20, 3
      %p57 = por %p55, %p56
      %p59 = scmp.ne.s32.totalorder %s42, %s58
      %p60 = scmp.eq.s32.totalorder %s20, 0
      %p61 = por %p59, %p60
      %s62 = ssub.s32 %s22, %s29
      %s63 = ssub.s32 %s21, %s33
      %s64 = sor.u32 %s62, %s63
      %p65 = scmp.eq.s32.totalorder %s64, 0
      %s67 = sadd.s32 %s66, 1
      %s68 = scalar_select %p65, %s66, %s67
      %p71 = pneg %p65
      %p72 = scmp.eq.s32.totalorder %s14, 3
      %p73 = por %p71, %p72
      %p74 = scmp.ne.s32.totalorder %s66, %s69
      %p75 = scmp.eq.s32.totalorder %s14, 0
      %p76 = por %p74, %p75
      %p77 = scmp.ne.s32.totalorder %s66, %s69
      %p78 = scmp.eq.s32.totalorder %s19, 3
      %p79 = por %p77, %p78
      %p80 = scmp.ne.s32.totalorder %s69, %s70
      %p81 = scmp.eq.s32.totalorder %s19, 0
      %p82 = por %p80, %p81
      %p83 = scmp.ne.s32.totalorder %s69, %s70
      %p84 = scmp.eq.s32.totalorder %s20, 3
      %p85 = por %p83, %p84
      %p87 = scmp.ne.s32.totalorder %s70, %s86
      %p88 = scmp.eq.s32.totalorder %s20, 0
      %p89 = por %p87, %p88
      %s90 = ssub.s32 %s22, %s29
      %s91 = ssub.s32 %s21, %s33
      %s92 = sor.u32 %s90, %s91
      %p93 = scmp.eq.s32.totalorder %s92, 0
      %s95 = sadd.s32 %s94, 1
      %s96 = scalar_select %p93, %s94, %s95
      %p99 = pneg %p93
      %p100 = scmp.eq.s32.totalorder %s14, 3
      %p101 = por %p99, %p100
      %p102 = scmp.ne.s32.totalorder %s94, %s97
      %p103 = scmp.eq.s32.totalorder %s14, 0
      %p104 = por %p102, %p103
      %p105 = scmp.ne.s32.totalorder %s94, %s97
      %p106 = scmp.eq.s32.totalorder %s19, 3
      %p107 = por %p105, %p106
      %p108 = scmp.ne.s32.totalorder %s97, %s98
      %p109 = scmp.eq.s32.totalorder %s19, 0
      %p110 = por %p108, %p109
      %p111 = scmp.ne.s32.totalorder %s97, %s98
      %p112 = scmp.eq.s32.totalorder %s20, 3
      %p113 = por %p111, %p112
      %p115 = scmp.ne.s32.totalorder %s98, %s114
      %p116 = scmp.eq.s32.totalorder %s20, 0
      %p117 = por %p115, %p116
      %s119 = sadd.s32 %s118, 1
      %p122 = scmp.eq.s32.totalorder %s14, 3
      %p123 = scmp.ne.s32.totalorder %s118, %s120
      %p124 = scmp.eq.s32.totalorder %s14, 0
      %p125 = por %p123, %p124
      %p126 = scmp.ne.s32.totalorder %s118, %s120
      %p127 = scmp.eq.s32.totalorder %s19, 3
      %p128 = por %p126, %p127
      %p129 = scmp.ne.s32.totalorder %s120, %s121
      %p130 = scmp.eq.s32.totalorder %s19, 0
      %p131 = por %p129, %p130
      %p132 = scmp.ne.s32.totalorder %s120, %s121
      %p133 = scmp.eq.s32.totalorder %s20, 3
      %p134 = por %p132, %p133
      %p136 = scmp.ne.s32.totalorder %s121, %s135
      %p137 = scmp.eq.s32.totalorder %s20, 0
      %p138 = por %p136, %p137
      %s140 = sadd.s32 %s139, 1
      %p143 = scmp.eq.s32.totalorder %s14, 3
      %p144 = scmp.ne.s32.totalorder %s139, %s141
      %p145 = scmp.eq.s32.totalorder %s14, 0
      %p146 = por %p144, %p145
      %p147 = scmp.ne.s32.totalorder %s139, %s141
      %p148 = scmp.eq.s32.totalorder %s19, 3
      %p149 = por %p147, %p148
      %p150 = scmp.ne.s32.totalorder %s141, %s142
      %p151 = scmp.eq.s32.totalorder %s19, 0
      %p152 = por %p150, %p151
      %p153 = scmp.ne.s32.totalorder %s141, %s142
      %p154 = scmp.eq.s32.totalorder %s20, 3
      %p155 = por %p153, %p154
      %p157 = scmp.ne.s32.totalorder %s142, %s156
      %p158 = scmp.eq.s32.totalorder %s20, 0
      %p159 = por %p157, %p158
      %s160 = ssub.s32 %s22, %s29
      %s161 = ssub.s32 %s21, %s33
      %s162 = sor.u32 %s160, %s161
      %p163 = scmp.eq.s32.totalorder %s162, 0
      %s165 = sadd.s32 %s164, 1
      %s166 = scalar_select %p163, %s164, %s165
      %p169 = pneg %p163
      %p170 = scmp.eq.s32.totalorder %s14, 3
      %p171 = por %p169, %p170
      %p172 = scmp.ne.s32.totalorder %s164, %s167
      %p173 = scmp.eq.s32.totalorder %s14, 0
      %p174 = por %p172, %p173
      %p175 = scmp.ne.s32.totalorder %s164, %s167
      %p176 = scmp.eq.s32.totalorder %s19, 3
      %p177 = por %p175, %p176
      %p178 = scmp.ne.s32.totalorder %s167, %s168
      %p179 = scmp.eq.s32.totalorder %s19, 0
      %p180 = por %p178, %p179
      %p181 = scmp.ne.s32.totalorder %s167, %s168
      %p182 = scmp.eq.s32.totalorder %s20, 3
      %p183 = por %p181, %p182
      %p185 = scmp.ne.s32.totalorder %s168, %s184
      %p186 = scmp.eq.s32.totalorder %s20, 0
      %p187 = por %p185, %p186
      %p188 = scmp.le.s32.totalorder 1, %s14
      %p189 = scmp.lt.s32.totalorder %s14, 5
      %p190 = pnand %p188, %p189
      %p191 = pneg %p190
      // Predicated region
      $region9: #{tpu_custom_call.1} parent=5 // pred_check
        _
      $region10: #{tpu_custom_call.1} parent=5 // pred_check_branch
        %193 = sbr.rel (%p190) target = $region12
      $region11: #{tpu_custom_call.1} parent=5 // pred_region
        %s194 = ssub.s32 %s14, 1
        // Predicated region
        $region13: #{tpu_custom_call.1} parent=11 // pred_check
          %p195 = pneg %p131
        $region14: #{tpu_custom_call.1} parent=11 // pred_check_branch
          %197 = sbr.rel (%p195) target = $region16
        $region15: #{tpu_custom_call.1} parent=11 // pred_region
          _
        $region16: #{tpu_custom_call.1} parent=11 // pred_fallthru
          _
        // Predicated region
        $region17: #{tpu_custom_call.1} parent=11 // pred_check
          %p198 = pneg %p152
        $region18: #{tpu_custom_call.1} parent=11 // pred_check_branch
          %200 = sbr.rel (%p198) target = $region20
        $region19: #{tpu_custom_call.1} parent=11 // pred_region
          _
        $region20: #{tpu_custom_call.1} parent=11 // pred_fallthru
          _
      $region12: #{tpu_custom_call.1} parent=5 // pred_fallthru
        _
      %p201 = scmp.lt.s32.totalorder %s14, 4
      // Predicated region
      $region21: #{tpu_custom_call.1} parent=5 // pred_check
        %p202 = pneg %p201
      $region22: #{tpu_custom_call.1} parent=5 // pred_check_branch
        %204 = sbr.rel (%p202) target = $region24
      $region23: #{tpu_custom_call.1} parent=5 // pred_region
        // Predicated region
        $region25: #{tpu_custom_call.1} parent=23 // pred_check
          %p205 = pneg %p48
        $region26: #{tpu_custom_call.1} parent=23 // pred_check_branch
          %207 = sbr.rel (%p205) target = $region28
        $region27: #{tpu_custom_call.1} parent=23 // pred_region
          %s208 = sand.u32 %s38, 1
          %s209 = sand.u32 %s38, 1
          %s210 = smul.addr %s209, 20
          %s211 = scalar_lea.vmem [#allocation3], %s210
          %s212 = smul.addr %s22, 10
          %s213 = sadd.s32 %s21, %s212
          %s214 = smul.addr %s213, 4
          %s215 = scalar_lea.vmem %s0, %s214
          // Predicated region
          $region29: #{tpu_custom_call.1} parent=27 // pred_check
            _
          $region30: #{tpu_custom_call.1} parent=27 // pred_check_branch
            %217 = sbr.rel (0) target = $region32
          $region31: #{tpu_custom_call.1} parent=27 // pred_region
            // Predicated region
            $region33: #{tpu_custom_call.1} parent=31 // pred_check
              _
            $region34: #{tpu_custom_call.1} parent=31 // pred_check_branch
              %219 = sbr.rel target = $region36
            $region35: #{tpu_custom_call.1} parent=31 // pred_region
              // Predicated region
              $region48: #{tpu_custom_call.1} parent=35 // pred_check
                _
              $region49: #{tpu_custom_call.1} parent=35 // pred_check_branch
                %243 = sbr.rel (0) target = $region51
              $region50: #{tpu_custom_call.1} parent=35 // pred_region
                loop: start=0, step=1, limit=1
                $region52: #{tpu_custom_call.1} parent=50 // loop_pre_header
                  _
                $region53: #{tpu_custom_call.1} parent=50 // loop_header
                  %s245 = sphi 0, %s249
                  %p246 = scmp.ge.s32.totalorder %s245, 1
                  %s250 = sphi %s215, %s215
                  %s251 = sphi %s211, %s211
                $region54: #{tpu_custom_call.1} parent=50 // loop_header_branch
                  %248 = sbr.rel (%p246) target = $region58
                $region55: #{tpu_custom_call.1} parent=50 // loop_body
                  _
                $region56: #{tpu_custom_call.1} parent=50 // loop_footer
                  %s249 = sadd.s32 1, %s245
                $region57: #{tpu_custom_call.1} parent=50 // loop_footer_branch
                  %244 = sbr.rel target = $region53
                $region58: #{tpu_custom_call.1} parent=50 // loop_exit
                  _
                %s253 = ssub.s32 16, 1
                loop: start=0, step=1, limit=1
                $region59: #{tpu_custom_call.1} parent=50 // loop_pre_header
                  _
                $region60: #{tpu_custom_call.1} parent=50 // loop_header
                  %s255 = sphi 0, %s259
                  %p256 = scmp.ge.s32.totalorder %s255, 1
                  %s260 = sphi %s215, %s215
                  %s261 = sphi %s211, %s211
                $region61: #{tpu_custom_call.1} parent=50 // loop_header_branch
                  %258 = sbr.rel (%p256) target = $region65
                $region62: #{tpu_custom_call.1} parent=50 // loop_body
                  %v262 = vld [vmem:[%s260] sm:%s253]
                  %263 = vst [vmem:[%s261] sm:%s253] %v262
                  %v264 = vld [vmem:[%s260 + $0x8] sm:%s253]
                  %265 = vst [vmem:[%s261 + $0x4] sm:%s253] %v264
                  %v266 = vld [vmem:[%s260 + $0x10] sm:%s253]
                  %267 = vst [vmem:[%s261 + $0x8] sm:%s253] %v266
                  %v268 = vld [vmem:[%s260 + $0x18] sm:%s253]
                  %269 = vst [vmem:[%s261 + $0xc] sm:%s253] %v268
                  %v270 = vld [vmem:[%s260 + $0x20] sm:%s253]
                  %271 = vst [vmem:[%s261 + $0x10] sm:%s253] %v270
                $region63: #{tpu_custom_call.1} parent=50 // loop_footer
                  %s259 = sadd.s32 1, %s255
                $region64: #{tpu_custom_call.1} parent=50 // loop_footer_branch
                  %254 = sbr.rel target = $region60
                $region65: #{tpu_custom_call.1} parent=50 // loop_exit
                  _
              $region51: #{tpu_custom_call.1} parent=35 // pred_fallthru
                _
            $region36: #{tpu_custom_call.1} parent=31 // pred_fallthru
              _
            // Predicated region
            $region37: #{tpu_custom_call.1} parent=31 // pred_check
              _
            $region38: #{tpu_custom_call.1} parent=31 // pred_check_branch
              %221 = sbr.rel (0) target = $region40
            $region39: #{tpu_custom_call.1} parent=31 // pred_region
              %s223 = ssub.s32 16, 1
              loop: start=0, step=1, limit=1
              $region41: #{tpu_custom_call.1} parent=39 // loop_pre_header
                _
              $region42: #{tpu_custom_call.1} parent=39 // loop_header
                %s225 = sphi 0, %s229
                %p226 = scmp.ge.s32.totalorder %s225, 1
                %s230 = sphi %s215, %s215
                %s231 = sphi %s211, %s211
              $region43: #{tpu_custom_call.1} parent=39 // loop_header_branch
                %228 = sbr.rel (%p226) target = $region47
              $region44: #{tpu_custom_call.1} parent=39 // loop_body
                %v232 = vld [vmem:[%s230] sm:%s223]
                %233 = vst [vmem:[%s231] sm:%s223] %v232
                %v234 = vld [vmem:[%s230 + $0x8] sm:%s223]
                %235 = vst [vmem:[%s231 + $0x4] sm:%s223] %v234
                %v236 = vld [vmem:[%s230 + $0x10] sm:%s223]
                %237 = vst [vmem:[%s231 + $0x8] sm:%s223] %v236
                %v238 = vld [vmem:[%s230 + $0x18] sm:%s223]
                %239 = vst [vmem:[%s231 + $0xc] sm:%s223] %v238
                %v240 = vld [vmem:[%s230 + $0x20] sm:%s223]
                %241 = vst [vmem:[%s231 + $0x10] sm:%s223] %v240
              $region45: #{tpu_custom_call.1} parent=39 // loop_footer
                %s229 = sadd.s32 1, %s225
              $region46: #{tpu_custom_call.1} parent=39 // loop_footer_branch
                %224 = sbr.rel target = $region42
              $region47: #{tpu_custom_call.1} parent=39 // loop_exit
                _
            $region40: #{tpu_custom_call.1} parent=31 // pred_fallthru
              _
          $region32: #{tpu_custom_call.1} parent=27 // pred_fallthru
            _
          %272 = vnop
        $region28: #{tpu_custom_call.1} parent=23 // pred_fallthru
          _
        // Predicated region
        $region66: #{tpu_custom_call.1} parent=23 // pred_check
          %p273 = pneg %p76
        $region67: #{tpu_custom_call.1} parent=23 // pred_check_branch
          %275 = sbr.rel (%p273) target = $region69
        $region68: #{tpu_custom_call.1} parent=23 // pred_region
          %s276 = sand.u32 %s66, 1
          %s277 = sand.u32 %s66, 1
          %s278 = smul.addr %s277, 12
          %s279 = scalar_lea.vmem [#allocation4], %s278
          %s280 = smul.addr %s22, 6
          %s281 = sadd.s32 %s21, %s280
          %s282 = smul.addr %s281, 4
          %s283 = scalar_lea.vmem %s1, %s282
          // Predicated region
          $region70: #{tpu_custom_call.1} parent=68 // pred_check
            _
          $region71: #{tpu_custom_call.1} parent=68 // pred_check_branch
            %285 = sbr.rel (0) target = $region73
          $region72: #{tpu_custom_call.1} parent=68 // pred_region
            // Predicated region
            $region74: #{tpu_custom_call.1} parent=72 // pred_check
              _
            $region75: #{tpu_custom_call.1} parent=72 // pred_check_branch
              %287 = sbr.rel target = $region77
            $region76: #{tpu_custom_call.1} parent=72 // pred_region
              // Predicated region
              $region89: #{tpu_custom_call.1} parent=76 // pred_check
                _
              $region90: #{tpu_custom_call.1} parent=76 // pred_check_branch
                %307 = sbr.rel (0) target = $region92
              $region91: #{tpu_custom_call.1} parent=76 // pred_region
                loop: start=0, step=1, limit=1
                $region93: #{tpu_custom_call.1} parent=91 // loop_pre_header
                  _
                $region94: #{tpu_custom_call.1} parent=91 // loop_header
                  %s309 = sphi 0, %s313
                  %p310 = scmp.ge.s32.totalorder %s309, 1
                  %s314 = sphi %s283, %s283
                  %s315 = sphi %s279, %s279
                $region95: #{tpu_custom_call.1} parent=91 // loop_header_branch
                  %312 = sbr.rel (%p310) target = $region99
                $region96: #{tpu_custom_call.1} parent=91 // loop_body
                  _
                $region97: #{tpu_custom_call.1} parent=91 // loop_footer
                  %s313 = sadd.s32 1, %s309
                $region98: #{tpu_custom_call.1} parent=91 // loop_footer_branch
                  %308 = sbr.rel target = $region94
                $region99: #{tpu_custom_call.1} parent=91 // loop_exit
                  _
                %s317 = ssub.s32 16, 1
                loop: start=0, step=1, limit=1
                $region100: #{tpu_custom_call.1} parent=91 // loop_pre_header
                  _
                $region101: #{tpu_custom_call.1} parent=91 // loop_header
                  %s319 = sphi 0, %s323
                  %p320 = scmp.ge.s32.totalorder %s319, 1
                  %s324 = sphi %s283, %s283
                  %s325 = sphi %s279, %s279
                $region102: #{tpu_custom_call.1} parent=91 // loop_header_branch
                  %322 = sbr.rel (%p320) target = $region106
                $region103: #{tpu_custom_call.1} parent=91 // loop_body
                  %v326 = vld [vmem:[%s324] sm:%s317]
                  %327 = vst [vmem:[%s325] sm:%s317] %v326
                  %v328 = vld [vmem:[%s324 + $0x8] sm:%s317]
                  %329 = vst [vmem:[%s325 + $0x4] sm:%s317] %v328
                  %v330 = vld [vmem:[%s324 + $0x10] sm:%s317]
                  %331 = vst [vmem:[%s325 + $0x8] sm:%s317] %v330
                $region104: #{tpu_custom_call.1} parent=91 // loop_footer
                  %s323 = sadd.s32 1, %s319
                $region105: #{tpu_custom_call.1} parent=91 // loop_footer_branch
                  %318 = sbr.rel target = $region101
                $region106: #{tpu_custom_call.1} parent=91 // loop_exit
                  _
              $region92: #{tpu_custom_call.1} parent=76 // pred_fallthru
                _
            $region77: #{tpu_custom_call.1} parent=72 // pred_fallthru
              _
            // Predicated region
            $region78: #{tpu_custom_call.1} parent=72 // pred_check
              _
            $region79: #{tpu_custom_call.1} parent=72 // pred_check_branch
              %289 = sbr.rel (0) target = $region81
            $region80: #{tpu_custom_call.1} parent=72 // pred_region
              %s291 = ssub.s32 16, 1
              loop: start=0, step=1, limit=1
              $region82: #{tpu_custom_call.1} parent=80 // loop_pre_header
                _
              $region83: #{tpu_custom_call.1} parent=80 // loop_header
                %s293 = sphi 0, %s297
                %p294 = scmp.ge.s32.totalorder %s293, 1
                %s298 = sphi %s283, %s283
                %s299 = sphi %s279, %s279
              $region84: #{tpu_custom_call.1} parent=80 // loop_header_branch
                %296 = sbr.rel (%p294) target = $region88
              $region85: #{tpu_custom_call.1} parent=80 // loop_body
                %v300 = vld [vmem:[%s298] sm:%s291]
                %301 = vst [vmem:[%s299] sm:%s291] %v300
                %v302 = vld [vmem:[%s298 + $0x8] sm:%s291]
                %303 = vst [vmem:[%s299 + $0x4] sm:%s291] %v302
                %v304 = vld [vmem:[%s298 + $0x10] sm:%s291]
                %305 = vst [vmem:[%s299 + $0x8] sm:%s291] %v304
              $region86: #{tpu_custom_call.1} parent=80 // loop_footer
                %s297 = sadd.s32 1, %s293
              $region87: #{tpu_custom_call.1} parent=80 // loop_footer_branch
                %292 = sbr.rel target = $region83
              $region88: #{tpu_custom_call.1} parent=80 // loop_exit
                _
            $region81: #{tpu_custom_call.1} parent=72 // pred_fallthru
              _
          $region73: #{tpu_custom_call.1} parent=68 // pred_fallthru
            _
          %332 = vnop
        $region69: #{tpu_custom_call.1} parent=23 // pred_fallthru
          _
        // Predicated region
        $region107: #{tpu_custom_call.1} parent=23 // pred_check
          %p333 = pneg %p104
        $region108: #{tpu_custom_call.1} parent=23 // pred_check_branch
          %335 = sbr.rel (%p333) target = $region110
        $region109: #{tpu_custom_call.1} parent=23 // pred_region
          %p336 = scmp.lt.s32.totalorder %s22, 1
          %s337 = scalar_select %p336, %s22, 1
          %p338 = scmp.lt.s32.totalorder %s21, 1
          %s339 = scalar_select %p338, %s21, 1
          %s340 = smul.addr %s337, 2
          %s341 = sadd.s32 %s339, %s340
          %s342 = scalar_lea.vmem %s2, %s341
        $region110: #{tpu_custom_call.1} parent=23 // pred_fallthru
          _
      $region24: #{tpu_custom_call.1} parent=5 // pred_fallthru
        _
      %p343 = scmp.le.s32.totalorder 1, %s14
      %p344 = scmp.lt.s32.totalorder %s14, 5
      %p345 = pnand %p343, %p344
      %p346 = pneg %p345
      // Predicated region
      $region111: #{tpu_custom_call.1} parent=5 // pred_check
        _
      $region112: #{tpu_custom_call.1} parent=5 // pred_check_branch
        %348 = sbr.rel (%p345) target = $region114
      $region113: #{tpu_custom_call.1} parent=5 // pred_region
        %s349 = ssub.s32 %s14, 1
        %s350 = sand.u32 %s41, 1
        %s351 = sand.u32 %s41, 1
        %s352 = smul.addr %s351, 20
        %s353 = scalar_lea.vmem [#allocation3], %s352
        // Predicated region
        $region115: #{tpu_custom_call.1} parent=113 // pred_check
          %p354 = pneg %p54
        $region116: #{tpu_custom_call.1} parent=113 // pred_check_branch
          %356 = sbr.rel (%p354) target = $region118
        $region117: #{tpu_custom_call.1} parent=113 // pred_region
          _
        $region118: #{tpu_custom_call.1} parent=113 // pred_fallthru
          _
        %s357 = sand.u32 %s69, 1
        %s358 = sand.u32 %s69, 1
        %s359 = smul.addr %s358, 12
        %s360 = scalar_lea.vmem [#allocation4], %s359
        // Predicated region
        $region119: #{tpu_custom_call.1} parent=113 // pred_check
          %p361 = pneg %p82
        $region120: #{tpu_custom_call.1} parent=113 // pred_check_branch
          %363 = sbr.rel (%p361) target = $region122
        $region121: #{tpu_custom_call.1} parent=113 // pred_region
          _
        $region122: #{tpu_custom_call.1} parent=113 // pred_fallthru
          _
        %s364 = sand.u32 %s41, 1
        %s365 = sand.u32 %s41, 1
        %s366 = smul.addr %s365, 20
        %s367 = scalar_lea.vmem [#allocation3], %s366
        %p368 = pneg %p54
        %p369 = pneg %p51
        %s370 = sand.u32 %s69, 1
        %s371 = sand.u32 %s69, 1
        %s372 = smul.addr %s371, 12
        %s373 = scalar_lea.vmem [#allocation4], %s372
        %p374 = pneg %p82
        %p375 = pneg %p79
        %p376 = scmp.lt.s32.totalorder %s24, 1
        %s377 = scalar_select %p376, %s24, 1
        %p378 = scmp.lt.s32.totalorder %s23, 1
        %s379 = scalar_select %p378, %s23, 1
        %s380 = smul.addr %s377, 2
        %s381 = sadd.s32 %s379, %s380
        %s382 = scalar_lea.vmem %s2, %s381
        %p383 = pneg %p110
        %p384 = pneg %p107
        %p385 = pneg %p131
        %p386 = pneg %p128
        %p387 = pneg %p152
        %p388 = pneg %p149
        %p389 = pneg %p180
        %p390 = pneg %p177
        %s391 = sand.u32 %s167, 1
        %s392 = scalar_lea.sflag [#allocation6], %s391
        %s393 = sand.u32 %s167, 1
        %s394 = smul.addr %s393, 8
        %s395 = scalar_lea.vmem [#allocation5], %s394
        %p396 = scmp.lt.s32.totalorder %s24, 1
        %s397 = scalar_select %p396, %s24, 1
        %p398 = scmp.lt.s32.totalorder %s23, 1
        %s399 = scalar_select %p398, %s23, 1
        %s400 = smul.addr %s397, 2
        %s401 = sadd.s32 %s399, %s400
        %s402 = scalar_lea.vmem %s2, %s401
        %v404 = vld [vmem:[%s402] sm:$0x1]
        %v405 = vld [vmem:[%s360] sm:$0xf]
        %v406 = vld [vmem:[%s360 + $0x4] sm:$0xf]
        %v407 = vld [vmem:[%s360 + $0x8] sm:$0x1]
        %v408 = vld [vmem:[%s353] sm:$0xf]
        %v409 = vld [vmem:[%s353 + $0x4] sm:$0xf]
        %v410 = vld [vmem:[%s353 + $0x8] sm:$0xf]
        %v411 = vld [vmem:[%s353 + $0xc] sm:$0xf]
        %v412 = vld [vmem:[%s353 + $0x10] sm:$0x3]
        %v413 = vunpack.c.l.bf16 %v405
        %v414 = vunpack.c.l.bf16 %v406
        %v416 = vlaneseq
        %v417 = vshrl.u32 %v416, 7
        %v418 = vsub.s32 0, %v417
        %v419 = vrot.slane %v404, %v418
        %v421 = vsub.f32 %v413, %v419
        %v422 = vsub.f32 %v414, %v419
        %v423 = vmul.f32 %v421, -0.5
        %v424 = vmul.f32 %v422, -0.5
        %v425 = vmul.f32 %v423, %v421
        %v426 = vmul.f32 %v424, %v422
        %v427 = vmul.f32 %v425, 1.442695
        %v428 = vpow.pop %v427
        %v429 = vmul.f32 %v426, 1.442695
        %v430 = vpow.pop %v429
        %v431 = vunpack.c.l.bf16 %v407
        %v432 = vsub.f32 %v431, %v419
        %v433 = vmul.f32 %v432, -0.5
        %v434 = vmul.f32 %v433, %v432
        %v435 = vmul.f32 %v434, 1.442695
        %v436 = vpow.pop %v435
        %vm439 = vcmask 1046528
        %v440 = vrot.slane %v430, 1
        %v441 = vrot.slane %v436, 1
        %v442 = vsel %vm439, %v440, %v441
        %v445 = vadd.f32 %v428, %v442
        %v446 = vadd.f32 %v430, %v441
        %v447 = vmul.f32 %v445, 0.5
        %v448 = vmul.f32 %v446, 0.5
        %v449 = vunpack.c.l.bf16 %v408
        %v450 = vunpack.c.l.bf16 %v409
        %v451 = vmul.f32 %v449, %v447
        %v452 = vmul.f32 %v450, %v448
        %v453 = vpack.c.bf16 %v452, %v451
        %v455 = vunpack.c.l.b16 %v453
        %v456 = vunpack.c.h.b16 %v453
        %v457 = vpack.c.b16 %v455, %v455
        %v458 = vpack.c.b16 %v456, %v456
        %461 = vst [vmem:[#allocation2] sm:$0xf] %v457
        %vm462 = vcmask 1040384
        %vm463 = vsmask.f32 256
        %vm464 = vmand %vm462, %vm463
        %v465 = vld [vmem:[#allocation2 + $0x4] sm:$0x1]
        %v466 = vsel %vm464, %v458, %v465
        %467 = vst [vmem:[#allocation2 + $0x4] sm:$0x1] %v466
        %v468 = vunpack.c.l.bf16 %v410
        %vm471 = vcmask 1040384
        %v472 = vrot.slane %v447, 7
        %v473 = vrot.slane %v448, 7
        %v474 = vsel %vm471, %v472, %v473
        %v477 = vmul.f32 %v450, %v472
        %v478 = vmul.f32 %v468, %v474
        %v479 = vpack.c.bf16 %v478, %v477
        %v481 = vunpack.c.l.b16 %v479
        %v482 = vunpack.c.h.b16 %v479
        %v483 = vpack.c.b16 %v481, %v481
        %v484 = vpack.c.b16 %v482, %v482
        %vm487 = vcmask 1043456
        %vm488 = vsmask.f32 7938
        %vm489 = vmand %vm487, %vm488
        %v490 = vld [vmem:[#allocation2 + $0x4] sm:$0xf]
        %v491 = vsel %vm489, %v483, %v490
        %492 = vst [vmem:[#allocation2 + $0x4] sm:$0xf] %v491
        %493 = vst [vmem:[#allocation2 + $0x8] sm:$0x1] %v484
        %v494 = vunpack.c.l.bf16 %v411
        %vm495 = vcmask 1041408
        %v496 = vrot.slane %v447, 6
        %v497 = vrot.slane %v448, 6
        %v498 = vsel %vm495, %v496, %v497
        %v501 = vmul.f32 %v468, %v496
        %v502 = vmul.f32 %v494, %v498
        %v503 = vpack.c.bf16 %v502, %v501
        %v505 = vunpack.c.l.b16 %v503
        %v506 = vunpack.c.h.b16 %v503
        %v507 = vpack.c.b16 %v505, %v505
        %v508 = vpack.c.b16 %v506, %v506
        %511 = vst [vmem:[#allocation2 + $0x8] sm:$0xe] %v507
        %vm512 = vcmask 1041408
        %vm513 = vsmask.f32 1280
        %vm514 = vmand %vm512, %vm513
        %v515 = vld [vmem:[#allocation2 + $0xc] sm:$0x3]
        %v516 = vsel %vm514, %v508, %v515
        %517 = vst [vmem:[#allocation2 + $0xc] sm:$0x3] %v516
        %v518 = vunpack.c.l.bf16 %v412
        %vm519 = vcmask 1042432
        %v520 = vrot.slane %v447, 5
        %v521 = vrot.slane %v448, 5
        %v522 = vsel %vm519, %v520, %v521
        %v525 = vmul.f32 %v494, %v520
        %v526 = vmul.f32 %v518, %v522
        %v527 = vpack.c.bf16 %v526, %v525
        %v529 = vunpack.c.l.b16 %v527
        %v530 = vunpack.c.h.b16 %v527
        %v531 = vpack.c.b16 %v529, %v529
        %v532 = vpack.c.b16 %v530, %v530
        %vm535 = vcmask 1043457
        %vm536 = vsmask.f32 7942
        %vm537 = vmand %vm535, %vm536
        %v538 = vld [vmem:[#allocation2 + $0xc] sm:$0xe]
        %v539 = vsel %vm537, %v531, %v538
        %540 = vst [vmem:[#allocation2 + $0xc] sm:$0xe] %v539
        %541 = vst [vmem:[#allocation2 + $0x10] sm:$0x3] %v532
        %v542 = vld [vmem:[%s3] sm:$0xf]
        %v543 = vld [vmem:[#allocation2] sm:$0xf]
        %v544 = vld [vmem:[#allocation2 + $0x4] sm:$0xf]
        %v545 = vld [vmem:[#allocation2 + $0x8] sm:$0xf]
        %v546 = vld [vmem:[#allocation2 + $0xc] sm:$0xf]
        %v547 = vld [vmem:[#allocation2 + $0x10] sm:$0x3]
        %v548 = vld [vmem:[%s4] sm:$0xff]
        %550 = vset.pattern.permute.xlu0 0
        %551 = vperm.xlu0 %550, %v548
        %v552 = vpop.permute.xlu0 %551
        %v559 = vunpack.c.l.b16 %v543
        %v560 = vunpack.c.l.b16 %v544
        %v561 = vunpack.c.l.b16 %v545
        %v562 = vunpack.c.l.b16 %v546
        %v563 = vunpack.c.l.b16 %v547
        %v564 = vpack.c.b16 %v560, %v559
        %v565 = vpack.c.b16 %v562, %v561
        %v566 = vpack.c.b16 %v563, %v563
        %vm569 = vcmask 293888
        %v571 = vsel %vm569, %v542, 0
        %v574 = vsel %vm495, %v566, 0
        %576 = vmatprep.subr.bf16.mxu0 0
        %577 = vmatpush1.bf16.msra.mxu0 0
        %578 = vmatprep.subr.bf16.mxu0 0
        %579 = vmatpush1.bf16.msra.mxu0 0
        %580 = vmatprep.subr.bf16.mxu0 0
        %581 = vmatpush1.bf16.msra.mxu0 0
        %582 = vmatprep.subr.bf16.mxu0 0
        %583 = vmatpush1.bf16.msra.mxu0 0
        %584 = vmatprep.subr.bf16.mxu0 0
        %585 = vmatpush1.bf16.msra.mxu0 0
        %586 = vmatprep.subr.bf16.mxu0 0
        %587 = vmatpush1.bf16.msra.mxu0 %v574
        %588 = vmatprep.subr.bf16.mxu0 0
        %589 = vmatpush1.bf16.msra.mxu0 %v565
        %590 = vmatprep.subr.bf16.mxu0 0
        %591 = vmatpush1.bf16.msra.mxu0 %v564
        %592 = vmatprep.subr.bf16.mxu0 0
        %593 = vmatpush2.bf16.msra.mxu0 0
        %594 = vmatprep.subr.bf16.mxu0 0
        %595 = vmatpush2.bf16.msra.mxu0 0
        %596 = vmatprep.subr.bf16.mxu0 0
        %597 = vmatpush2.bf16.msra.mxu0 0
        %598 = vmatprep.subr.bf16.mxu0 0
        %599 = vmatpush2.bf16.msra.mxu0 0
        %600 = vmatprep.subr.bf16.mxu0 0
        %601 = vmatpush2.bf16.msra.mxu0 0
        %602 = vmatprep.subr.bf16.mxu0 0
        %603 = vmatpush2.bf16.msra.mxu0 0
        %604 = vmatprep.subr.bf16.mxu0 0
        %605 = vmatpush2.bf16.msra.mxu0 0
        %606 = vmatprep.subr.bf16.mxu0 0
        %607 = vmatpush2.bf16.msra.mxu0 0
        %608 = vmatprep.mubr.bf16.mxu0 0
        %609 = vmatmul.mubr.bf16.gmra.mxu0 %v571
        %v610 = vpop.f32.mrf.mxu0
        %v611 = vadd.f32 %v552, %v610
        %v612 = vpop.f32.mrf.mxu0
        %v613 = vpop.f32.mrf.mxu0
        %v614 = vpop.f32.mrf.mxu0
        %615 = vdwg.mxu0
        %616 = vst [vmem:[%s395] sm:$0xff] %v611
        %s617 = sand.u32 %s167, 1
        %s618 = scalar_lea.sflag [#allocation6], %s617
        %s619 = sand.u32 %s167, 1
        %s620 = smul.addr %s619, 8
        %s621 = scalar_lea.vmem [#allocation5], %s620
        // Predicated region
        $region123: #{tpu_custom_call.1} parent=113 // pred_check
          %p622 = pneg %p177
        $region124: #{tpu_custom_call.1} parent=113 // pred_check_branch
          %624 = sbr.rel (%p622) target = $region126
        $region125: #{tpu_custom_call.1} parent=113 // pred_region
          %s626 = ssub.s32 128, 128
          %627 = vsyncadd %s618, %s626
          %s628 = smul.addr %s24, 2
          %s629 = sadd.s32 %s23, %s628
          %s630 = smul.addr %s629, 128
          %s631 = scalar_lea.hbm %s5, %s630
          %s633 = sshll.u32 %s621, 4
          %s634 = int_to_ptr.vmem [resolvable:$true] %s633
          %636 = dma.vmem_to_hbm [thread:$0]  %s634, 128, %s631, %s618
        $region126: #{tpu_custom_call.1} parent=113 // pred_fallthru
          _
      $region114: #{tpu_custom_call.1} parent=5 // pred_fallthru
        _
      %p637 = scmp.le.s32.totalorder 2, %s14
      // Predicated region
      $region127: #{tpu_custom_call.1} parent=5 // pred_check
        %p638 = pneg %p637
      $region128: #{tpu_custom_call.1} parent=5 // pred_check_branch
        %640 = sbr.rel (%p638) target = $region130
      $region129: #{tpu_custom_call.1} parent=5 // pred_region
        %s641 = ssub.s32 %s14, 2
        // Predicated region
        $region131: #{tpu_custom_call.1} parent=129 // pred_check
          %p642 = pneg %p183
        $region132: #{tpu_custom_call.1} parent=129 // pred_check_branch
          %644 = sbr.rel (%p642) target = $region134
        $region133: #{tpu_custom_call.1} parent=129 // pred_region
          %s645 = sand.u32 %s168, 1
          %s646 = scalar_lea.sflag [#allocation6], %s645
          %s647 = sand.u32 %s168, 1
          %s648 = smul.addr %s647, 8
          %s649 = scalar_lea.vmem [#allocation5], %s648
          %650 = dma.done %s646, 128
        $region134: #{tpu_custom_call.1} parent=129 // pred_fallthru
          _
      $region130: #{tpu_custom_call.1} parent=5 // pred_fallthru
        _
    $region6: #{tpu_custom_call.1} parent=1 // loop_footer
      %s18 = sadd.s32 1, %s14
    $region7: #{tpu_custom_call.1} parent=1 // loop_footer_branch
      %13 = sbr.rel target = $region3
    $region8: #{tpu_custom_call.1} parent=1 // loop_exit
      _
    %651 = vsyncpa [#allocation6], 1
    %s652 = scalar_lea.sflag [#allocation6], 1
    %653 = vsyncpa %s652, 1

</llo_original>
